<compile_context>
chip_gen: v6e
topology: v6e:2x2x1
jax: 0.10.0
libtpu: 0.0.40
codegen_flags: <defaults>
</compile_context>

<pallas_src>
import functools

import numpy as np
import jax
import jax.numpy as jnp
from jax.experimental import pallas as pl
from jax.experimental.pallas import tpu as pltpu

_EPS = 1e-12


# ---------------------------------------------------------------------------
# Hardware-dependent tiling parameters
# ---------------------------------------------------------------------------
@functools.lru_cache(maxsize=None)
def _device_kind():
    try:
        return jax.devices()[0].device_kind.lower()
    except Exception:
        return ""


@functools.lru_cache(maxsize=None)
def _vmem_params():
    """(tile_budget_bytes, vmem_limit_bytes) for the current TPU generation."""
    phys = None
    try:
        phys = int(getattr(pltpu.get_tpu_info(), "vmem_capacity_bytes"))
    except Exception:
        phys = None
    if phys is None:
        kind = _device_kind()
        phys = (64 << 20) if ("v7" in kind or "7x" in kind) else (128 << 20)
    if phys <= (64 << 20):
        # v7x: 64 MiB physical per TensorCore -> keep explicit headroom for
        # Mosaic internal scratch and compute temporaries.
        return 26 << 20, 46 << 20
    # v5e / v6e (and v4/v5p): 128 MiB physical.
    return 52 << 20, 100 << 20


@functools.lru_cache(maxsize=None)
def _num_tensorcores():
    kind = _device_kind()
    return 2 if any(t in kind for t in ("v7", "7x", "v4", "v5p")) else 1


def _choose_block_rows(R, bytes_per_row, budget, cap=None):
    """Largest row tile fitting the VMEM budget (full extent if it all fits)."""
    br = int(budget) // max(int(bytes_per_row), 1)
    if cap is not None:
        br = min(br, int(cap))
    if br >= R or R <= 8:
        return R                       # single full-extent block
    return max(8, br - br % 8)


def _cparams(sem):
    _, limit = _vmem_params()
    return pltpu.CompilerParams(dimension_semantics=sem, vmem_limit_bytes=limit)


# ---------------------------------------------------------------------------
# Kernels
# ---------------------------------------------------------------------------
def _mix_kernel(scale_ref, *rest, K):
    # o = sum_k scale_k * x_k   with scale_k = gamma * softmax(w)_k (folded in glue)
    x_refs, o_ref = rest[:K], rest[K]
    acc = x_refs[0][...].astype(jnp.float32) * scale_ref[0]
    for k in range(1, K):
        acc = acc + x_refs[k][...].astype(jnp.float32) * scale_ref[k]
    o_ref[...] = acc.astype(o_ref.dtype)


def _ln_mix_kernel(scale_ref, bias_ref, *rest, K):
    # o = (sum_k x_k * scale_k) + bias_total
    #   scale_k = gamma*w_k/std_k,  bias_total = sum_k(-mean_k*scale_k)  (glue)
    x_refs, o_ref = rest[:K], rest[K]
    acc = x_refs[0][...].astype(jnp.float32) * scale_ref[0]
    for k in range(1, K):
        acc = acc + x_refs[k][...].astype(jnp.float32) * scale_ref[k]
    o_ref[...] = (acc + bias_ref[0]).astype(o_ref.dtype)


def _masked_stats_kernel(shift_ref, m_ref, *rest,
                         K, R, block_rows, blocks_per_core, nb, guard_rows):
    # Fused reduction: per-layer, per-column sum((x-shift)*m) and
    # sum(((x-shift)*m)^2) accumulated into a (1, K, D) block per core split.
    x_refs = rest[:K]
    s_ref, ss_ref = rest[K], rest[K + 1]
    c = pl.program_id(0)
    j = pl.program_id(1)

    @pl.when(j == 0)
    def _():
        s_ref[...] = jnp.zeros_like(s_ref)
        ss_ref[...] = jnp.zeros_like(ss_ref)

    def accumulate(mask_tail_rows):
        m = m_ref[...]                                          # (block_rows, 1)
        if mask_tail_rows:
            row0 = (c * blocks_per_core + j) * block_rows
            rows = jax.lax.broadcasted_iota(jnp.int32, (block_rows, 1), 0) + row0
            valid = rows < R
        for k in range(K):
            xk = x_refs[k][...].astype(jnp.float32)
            xm = (xk - shift_ref[k]) * m
            if mask_tail_rows:
                # Zero rows past R (ragged tail / clamped duplicate block).
                # Stale VMEM garbage * 0 could still be NaN -> select AFTER mul.
                xm = jnp.where(valid, xm, 0.0)
            s_ref[0, k:k + 1, :] += jnp.sum(xm, axis=0, keepdims=True)
            ss_ref[0, k:k + 1, :] += jnp.sum(xm * xm, axis=0, keepdims=True)

    if guard_rows:
        glob = c * blocks_per_core + j
        # Interior blocks are fully valid -> unmasked fast path; only the last
        # real block and clamped duplicates pay for iota/compare/select.
        @pl.when(glob < nb - 1)
        def _():
            accumulate(False)

        @pl.when(glob >= nb - 1)
        def _():
            accumulate(True)
    else:
        accumulate(False)


# ---------------------------------------------------------------------------
# Wrapper (softmax / scalar folding / reshapes are glue; mix + reductions in Pallas)
# ---------------------------------------------------------------------------
def scalar_mix_forward(tensors, scalar_parameters, gamma, *,
                       do_layer_norm=False, mask=None,
                       layer_dropout=None, dropout_key=None,
                       dropout_value=-1e20, out_dtype=None,
                       _max_block_rows=None):
    K = len(tensors)
    orig_shape = tuple(tensors[0].shape)
    D = int(orig_shape[-1])
    in_bytes = jnp.dtype(tensors[0].dtype).itemsize
    # float32 output matches torch's type promotion (f32 weights * inputs);
    # callers may request the input dtype to halve HBM write traffic.
    out_dtype = jnp.float32 if out_dtype is None else out_dtype
    out_bytes = jnp.dtype(out_dtype).itemsize

    weights = jnp.asarray(scalar_parameters, jnp.float32).reshape(K)
    if layer_dropout:
        # torch: torch.where(dropout_mask.uniform_() > layer_dropout, weights, dropout_fill)
        # TODO(synk): skip the HBM read of layers whose softmax weight was dropped to ~0
        # (scalar-prefetched survivor indices driving a data-dependent index_map).
        u = jax.random.uniform(dropout_key, (K,), jnp.float32)
        weights = jnp.where(u > layer_dropout, weights,
                            jnp.full((K,), dropout_value, jnp.float32))
    normed_weights = jax.nn.softmax(weights, axis=0)                 # (K,)
    gamma_f = jnp.asarray(gamma, jnp.float32).reshape(())

    budget, _ = _vmem_params()
    smem = pl.BlockSpec(memory_space=pltpu.MemorySpace.SMEM)

    if not do_layer_norm:
        # Lane-dense 2-D view: widest 128-multiple lane fold that divides N.
        N = int(np.prod(orig_shape))
        lanes = D
        for cand in (1024, 512, 256, 128):
            if N % cand == 0:
                lanes = cand
                break
        rows = N // lanes
        xs = [t.reshape(rows, lanes) for t in tensors]
        # bytes/row: double-buffered K inputs + output, plus ~6 f32 compute temps.
        bpr = lanes * (2 * K * in_bytes + 2 * out_bytes + 6 * 4)
        br = _choose_block_rows(rows, bpr, budget, _max_block_rows)
        nb = (rows + br - 1) // br
        scale = gamma_f * normed_weights                             # (K,)

        spec = pl.BlockSpec((br, lanes), lambda i: (i, 0))
        out = pl.pallas_call(
            functools.partial(_mix_kernel, K=K),
            out_shape=jax.ShapeDtypeStruct((rows, lanes), out_dtype),
            grid_spec=pltpu.PrefetchScalarGridSpec(
                num_scalar_prefetch=0, grid=(nb,),
                in_specs=[smem] + [spec] * K,
                out_specs=spec),
            compiler_params=_cparams(("parallel",)),
        )(scale, *xs)
        return out.reshape(orig_shape)

    assert mask is not None, "mask is required when do_layer_norm=True"
    lead = orig_shape[:-1]
    R = int(np.prod(lead))
    xs = [t.reshape(R, D) for t in tensors]
    mask_f = mask.astype(jnp.float32).reshape(R, 1)
    num_elements_not_masked = jnp.sum(mask_f) * D

    # Cheap per-layer shift (sample mean of the first few rows) for a
    # numerically stable single-pass variance: var = E[(x-c)^2] - E[x-c]^2
    # stays accurate when |mean| >> std, at negligible extra HBM traffic.
    sample = min(R, 8)
    shift = jnp.stack([jnp.mean(x[:sample].astype(jnp.float32)) for x in xs])  # (K,)

    # bytes/row: double-buffered K inputs + output + padded mask tile (512 B)
    # plus ~8 f32 compute temps (cast, shift, mask-broadcast, square, select).
    bpr = 2 * K * D * in_bytes + 2 * D * out_bytes + 512 + 8 * D * 4
    br = _choose_block_rows(R, bpr, budget, _max_block_rows)
    nb = (R + br - 1) // br
    split = _num_tensorcores() if nb >= 2 else 1                     # v7x/v4/v5p only
    split = min(split, nb)
    nbh = (nb + split - 1) // split
    guard = (split * nbh != nb) or (nb * br != R)

    def data_map(c, j):
        return (jnp.minimum(c * nbh + j, nb - 1), 0)

    x_red_spec = pl.BlockSpec((br, D), data_map)
    m_red_spec = pl.BlockSpec((br, 1), data_map)
    acc_spec = pl.BlockSpec((1, K, D), lambda c, j: (c, 0, 0))

    s_acc, ss_acc = pl.pallas_call(
        functools.partial(_masked_stats_kernel, K=K, R=R, block_rows=br,
                          blocks_per_core=nbh, nb=nb, guard_rows=guard),
        out_shape=(jax.ShapeDtypeStruct((split, K, D), jnp.float32),
                   jax.ShapeDtypeStruct((split, K, D), jnp.float32)),
        grid_spec=pltpu.PrefetchScalarGridSpec(
            num_scalar_prefetch=0, grid=(split, nbh),
            in_specs=[smem, m_red_spec] + [x_red_spec] * K,
            out_specs=[acc_spec, acc_spec]),
        compiler_params=_cparams(("parallel", "arbitrary")),
    )(shift, mask_f, *xs)

    s_tot = jnp.sum(s_acc, axis=(0, 2))                              # (K,) sum(x - shift)
    ss_tot = jnp.sum(ss_acc, axis=(0, 2))                            # (K,) sum((x - shift)^2)
    d_mean = s_tot / num_elements_not_masked                         # mean_k - shift_k
    mean = shift + d_mean
    var = jnp.maximum(ss_tot / num_elements_not_masked - d_mean * d_mean, 0.0)
    inv_std = jax.lax.rsqrt(var + _EPS)
    scale = gamma_f * normed_weights * inv_std                       # (K,)
    bias_total = jnp.sum(-mean * scale).reshape(1)                   # single fused bias

    spec = pl.BlockSpec((br, D), lambda i: (i, 0))
    out = pl.pallas_call(
        functools.partial(_ln_mix_kernel, K=K),
        out_shape=jax.ShapeDtypeStruct((R, D), out_dtype),
        grid_spec=pltpu.PrefetchScalarGridSpec(
            num_scalar_prefetch=0, grid=(nb,),
            in_specs=[smem, smem] + [spec] * K,
            out_specs=spec),
        compiler_params=_cparams(("parallel",)),
    )(scale, bias_total, *xs)
    return out.reshape(orig_shape)


# ---------------------------------------------------------------------------
# Pure-JAX reference mirroring the PyTorch forward (two-pass variance)
# ---------------------------------------------------------------------------
def reference_forward(tensors, scalar_parameters, gamma, *, do_layer_norm=False, mask=None):
    K = len(tensors)
    weights = jnp.asarray(scalar_parameters, jnp.float32).reshape(K)
    nw = jax.nn.softmax(weights, axis=0)
    gamma = jnp.asarray(gamma, jnp.float32).reshape(1)
    if not do_layer_norm:
        pieces = [nw[k] * tensors[k].astype(jnp.float32) for k in range(K)]
        return gamma * sum(pieces)
    mask_f = mask.astype(jnp.float32)
    bm = mask_f[..., None]
    D = tensors[0].shape[-1]
    n = jnp.sum(mask_f) * D
    pieces = []
    for k in range(K):
        t = tensors[k].astype(jnp.float32)
        tm = t * bm
        mean = jnp.sum(tm) / n
        var = jnp.sum(((tm - mean) * bm) ** 2) / n
        pieces.append(nw[k] * (t - mean) / jnp.sqrt(var + _EPS))
    return gamma * sum(pieces)


# ---------------------------------------------------------------------------
if __name__ == "__main__":
    root_key = jax.random.PRNGKey(0)

    def run_case(K, B, T, D, dtype, do_ln, tol, *, offset=0.0, out_dtype=None,
                 max_block_rows=None, case_id=0):
        case_key = jax.random.fold_in(
            root_key, K * 1000000 + B * 100000 + T * 1000 + D + case_id)
        keys = jax.random.split(case_key, K)
        tensors = [(jax.random.normal(keys[i], (B, T, D), jnp.float32) + offset)
                   .astype(dtype) for i in range(K)]
        scalar_parameters = np.linspace(-0.5, 0.5, K).astype(np.float32)
        scalar_parameters[-1] = -1e20          # pruned layer -> ~0 softmax mass
        gamma = np.asarray([1.0], np.float32)
        lengths = jnp.maximum(T - 3 * jnp.arange(B), 1)
        mask = jnp.arange(T)[None, :] < lengths[:, None]       # (B, T) bool

        out = scalar_mix_forward(tensors, scalar_parameters, gamma,
                                 do_layer_norm=do_ln, mask=mask if do_ln else None,
                                 out_dtype=out_dtype, _max_block_rows=max_block_rows)
        ref = reference_forward(tensors, scalar_parameters, gamma,
                                do_layer_norm=do_ln, mask=mask if do_ln else None)
        jax.block_until_ready(out)
        out_f = np.asarray(jnp.asarray(out, jnp.float32))
        np.testing.assert_allclose(out_f, np.asarray(ref), rtol=tol, atol=tol)

    # Small smoke shapes (the module's typical (batch, timesteps, dim) layout).
    run_case(K=4, B=2, T=8, D=32, dtype=jnp.float32, do_ln=False, tol=1e-5, case_id=1)
    run_case(K=4, B=2, T=8, D=32, dtype=jnp.float32, do_ln=True, tol=1e-4, case_id=2)
    # bf16 inputs: no wrapper upcast, cast happens inside the kernel.
    run_case(K=4, B=2, T=8, D=32, dtype=jnp.bfloat16, do_ln=False, tol=1e-5, case_id=3)
    # bf16 output (caller-selected) to halve write traffic.
    run_case(K=4, B=2, T=8, D=32, dtype=jnp.bfloat16, do_ln=False, tol=2e-2,
             out_dtype=jnp.bfloat16, case_id=4)
    # Non-multiple-of-128 feature dim (lane fallback path).
    run_case(K=3, B=3, T=37, D=160, dtype=jnp.float32, do_ln=False, tol=1e-5, case_id=5)
    run_case(K=3, B=3, T=37, D=160, dtype=jnp.float32, do_ln=True, tol=1e-4, case_id=6)
    # Force multi-block grids to exercise partial tails, the pl.when-gated
    # masking fast path and cross-step accumulation.
    run_case(K=3, B=3, T=37, D=160, dtype=jnp.float32, do_ln=False, tol=1e-5,
             max_block_rows=16, case_id=7)
    run_case(K=3, B=3, T=37, D=160, dtype=jnp.float32, do_ln=True, tol=1e-4,
             max_block_rows=16, case_id=8)
    # Large-mean activations: validates the shifted single-pass variance
    # against the torch-style two-pass reference.
    run_case(K=3, B=2, T=12, D=64, dtype=jnp.float32, do_ln=True, tol=1e-3,
             offset=30.0, case_id=9)

    # Layer-dropout branch (replicate the in-wrapper PRNG decision for the ref).
    kd = jax.random.fold_in(root_key, 777)
    Kd, Bd, Td, Dd, p = 5, 2, 8, 32, 0.4
    dkeys = jax.random.split(jax.random.fold_in(root_key, 778), Kd)
    d_tensors = [jax.random.normal(dkeys[i], (Bd, Td, Dd), jnp.float32) for i in range(Kd)]
    d_params = np.linspace(-0.3, 0.3, Kd).astype(np.float32)
    d_gamma = np.asarray([0.9], np.float32)
    d_out = scalar_mix_forward(d_tensors, d_params, d_gamma,
                               layer_dropout=p, dropout_key=kd)
    u = jax.random.uniform(kd, (Kd,), jnp.float32)
    eff = jnp.where(u > p, jnp.asarray(d_params, jnp.float32),
                    jnp.full((Kd,), -1e20, jnp.float32))
    d_ref = reference_forward(d_tensors, eff, d_gamma)
    jax.block_until_ready(d_out)
    np.testing.assert_allclose(np.asarray(d_out), np.asarray(d_ref), rtol=1e-5, atol=1e-5)

    print("KERNEL_OK")
</pallas_src>

<mosaic_0001>
module attributes {stable_mosaic.version = 11 : i64} {
  func.func @_mix_kernel(%arg0: i32, %arg1: memref<4xf32, #tpu.memory_space<smem>>, %arg2: memref<1x512xf32, #tpu.memory_space<vmem>>, %arg3: memref<1x512xf32, #tpu.memory_space<vmem>>, %arg4: memref<1x512xf32, #tpu.memory_space<vmem>>, %arg5: memref<1x512xf32, #tpu.memory_space<vmem>>, %arg6: memref<1x512xf32, #tpu.memory_space<vmem>>) attributes {dimension_semantics = [#tpu.dimension_semantics<parallel>], iteration_bounds = array<i64: 1>, scalar_prefetch = 0 : i64, scratch_operands = 0 : i64, tpu.core_type = #tpu.core_type<tc>, window_params = [{transform_indices = @transform_0, window_bounds = array<i64: 4>}, {transform_indices = @transform_1, window_bounds = array<i64: 1, 512>}, {transform_indices = @transform_2, window_bounds = array<i64: 1, 512>}, {transform_indices = @transform_3, window_bounds = array<i64: 1, 512>}, {transform_indices = @transform_4, window_bounds = array<i64: 1, 512>}, {transform_indices = @transform_5, window_bounds = array<i64: 1, 512>}]} {
    %c0 = arith.constant 0 : index
    %c0_0 = arith.constant 0 : index
    %0 = vector.load %arg2[%c0, %c0_0] : memref<1x512xf32, #tpu.memory_space<vmem>>, vector<1x512xf32>
    %c0_1 = arith.constant 0 : index
    %1 = memref.load %arg1[%c0_1] : memref<4xf32, #tpu.memory_space<smem>>
    %2 = vector.broadcast %1 : f32 to vector<1x512xf32>
    %3 = arith.mulf %0, %2 : vector<1x512xf32>
    %c0_2 = arith.constant 0 : index
    %c0_3 = arith.constant 0 : index
    %4 = vector.load %arg3[%c0_2, %c0_3] : memref<1x512xf32, #tpu.memory_space<vmem>>, vector<1x512xf32>
    %c1 = arith.constant 1 : index
    %5 = memref.load %arg1[%c1] : memref<4xf32, #tpu.memory_space<smem>>
    %6 = vector.broadcast %5 : f32 to vector<1x512xf32>
    %7 = arith.mulf %4, %6 : vector<1x512xf32>
    %8 = arith.addf %3, %7 : vector<1x512xf32>
    %c0_4 = arith.constant 0 : index
    %c0_5 = arith.constant 0 : index
    %9 = vector.load %arg4[%c0_4, %c0_5] : memref<1x512xf32, #tpu.memory_space<vmem>>, vector<1x512xf32>
    %c2 = arith.constant 2 : index
    %10 = memref.load %arg1[%c2] : memref<4xf32, #tpu.memory_space<smem>>
    %11 = vector.broadcast %10 : f32 to vector<1x512xf32>
    %12 = arith.mulf %9, %11 : vector<1x512xf32>
    %13 = arith.addf %8, %12 : vector<1x512xf32>
    %c0_6 = arith.constant 0 : index
    %c0_7 = arith.constant 0 : index
    %14 = vector.load %arg5[%c0_6, %c0_7] : memref<1x512xf32, #tpu.memory_space<vmem>>, vector<1x512xf32>
    %c3 = arith.constant 3 : index
    %15 = memref.load %arg1[%c3] : memref<4xf32, #tpu.memory_space<smem>>
    %16 = vector.broadcast %15 : f32 to vector<1x512xf32>
    %17 = arith.mulf %14, %16 : vector<1x512xf32>
    %18 = arith.addf %13, %17 : vector<1x512xf32>
    %c0_8 = arith.constant 0 : index
    %c0_9 = arith.constant 0 : index
    %19 = vector.load %arg6[%c0_8, %c0_9] : memref<1x512xf32, #tpu.memory_space<vmem>>, vector<1x512xf32>
    tpu.vector_store %arg6[%c0_8, %c0_9], %18 {strides = array<i32>} : memref<1x512xf32, #tpu.memory_space<vmem>>, vector<1x512xf32>,
    return
  }
  func.func @transform_0(%arg0: i32) -> i32 {
    %c0_i32 = arith.constant 0 : i32
    %c0_i32_0 = arith.constant 0 : i32
    return %c0_i32 : i32
  }
  func.func @transform_1(%arg0: i32) -> (i32, i32) {
    %c0_i32 = arith.constant 0 : i32
    %c0_i32_0 = arith.constant 0 : i32
    return %arg0, %c0_i32 : i32, i32
  }
  func.func @transform_2(%arg0: i32) -> (i32, i32) {
    %c0_i32 = arith.constant 0 : i32
    %c0_i32_0 = arith.constant 0 : i32
    return %arg0, %c0_i32 : i32, i32
  }
  func.func @transform_3(%arg0: i32) -> (i32, i32) {
    %c0_i32 = arith.constant 0 : i32
    %c0_i32_0 = arith.constant 0 : i32
    return %arg0, %c0_i32 : i32, i32
  }
  func.func @transform_4(%arg0: i32) -> (i32, i32) {
    %c0_i32 = arith.constant 0 : i32
    %c0_i32_0 = arith.constant 0 : i32
    return %arg0, %c0_i32 : i32, i32
  }
  func.func @transform_5(%arg0: i32) -> (i32, i32) {
    %c0_i32 = arith.constant 0 : i32
    %c0_i32_0 = arith.constant 0 : i32
    return %arg0, %c0_i32 : i32, i32
  }
}

</mosaic_0001>

<llo_original>
// kernel: tpu_custom_call.1
$region0: #{tpu_custom_call.1}
  #allocation0 [shape = 'u32[]', space=smem, size = 0x4, offset = 0x4, fixed_abs, tag = 'smem constant byte address 0x4 - core index']
  #allocation1 [shape = 'u32[144,128]{1,0:T(1,128)}', space=vmem, size = 0x12000, scoped, tag = 'internal scratch']
  %s0 = inlined_call_operand.hbm [shape: f32[4], index: 0, kind: input, shape index: {}]
  %s1 = inlined_call_operand.hbm [shape: f32[1,512], index: 1, kind: input, shape index: {}]
  %s2 = inlined_call_operand.hbm [shape: f32[1,512], index: 2, kind: input, shape index: {}]
  %s3 = inlined_call_operand.vmem [shape: f32[1,512], index: 3, kind: input, shape index: {}]
  %s4 = inlined_call_operand.hbm [shape: f32[1,512], index: 4, kind: input, shape index: {}]
  %s5 = inlined_call_operand.hbm [shape: f32[1,512], index: 5, kind: output, shape index: {}]
  %s6 = sld [smem:[#allocation0]]
  $region46: #{tpu_custom_call.1} parent=0
    _
  %s8 = ssub.s32 1, %s6
  %s9 = scalar_select 0, %s8, %s6
  $region1: #{tpu_custom_call.1} parent=0
    #allocation2 [shape = 'u8[512]{0}', space=smem, size = 0x200, scoped, tag = 'input window, operand 0, single buffered']
    #allocation3 [shape = 's32[1]{0}', space=sflag, size = 0x4, scoped, tag = 'scoped memory for tpu_custom_call.1']
    #allocation4 [shape = 's32[1]{0}', space=sflag, size = 0x4, scoped, tag = 'scoped memory for tpu_custom_call.1']
    #allocation5 [shape = 's32[1]{0}', space=sflag, size = 0x4, scoped, tag = 'scoped memory for tpu_custom_call.1']
    #allocation6 [shape = 'u8[2048]{0}', space=vmem, size = 0x800, scoped, tag = 'input window, operand 1, single buffered']
    #allocation7 [shape = 'u8[2048]{0}', space=vmem, size = 0x800, scoped, tag = 'input window, operand 2, single buffered']
    #allocation8 [shape = 's32[1]{0}', space=sflag, size = 0x4, scoped, tag = 'scoped memory for tpu_custom_call.1']
    #allocation9 [shape = 'u8[2048]{0}', space=vmem, size = 0x800, scoped, tag = 'input window, operand 4, single buffered']
    #allocation10 [shape = 'u8[2048]{0}', space=vmem, size = 0x800, scoped, tag = 'output window, operand 0, single buffered']
    %10 = vsyncpa [#allocation5], 0
    %11 = vsyncpa [#allocation3], 0
    %12 = vsyncpa [#allocation8], 0
    %13 = vsyncpa [#allocation4], 0
    // Predicated region
    $region2: #{tpu_custom_call.1} parent=1 // pred_check
      _
    $region3: #{tpu_custom_call.1} parent=1 // pred_check_branch
      %15 = sbr.rel (0) target = $region5
    $region4: #{tpu_custom_call.1} parent=1 // pred_region
      %s17 = ssub.s32 16, 16
      %18 = vsyncadd [#allocation5], %s17
      %21 = dma.hbm_to_smem %s0, 16, [#allocation2], [#allocation5]
    $region5: #{tpu_custom_call.1} parent=1 // pred_fallthru
      _
    // Predicated region
    $region6: #{tpu_custom_call.1} parent=1 // pred_check
      _
    $region7: #{tpu_custom_call.1} parent=1 // pred_check_branch
      %23 = sbr.rel (0) target = $region9
    $region8: #{tpu_custom_call.1} parent=1 // pred_region
      %s25 = ssub.s32 64, 64
      %26 = vsyncadd [#allocation3], %s25
      %s28 = sshll.u32 [#allocation6], 4
      %s29 = int_to_ptr.vmem [resolvable:$true] %s28
      %31 = dma.hbm_to_vmem [thread:$0]  %s1, 64, %s29, [#allocation3]
    $region9: #{tpu_custom_call.1} parent=1 // pred_fallthru
      _
    // Predicated region
    $region10: #{tpu_custom_call.1} parent=1 // pred_check
      _
    $region11: #{tpu_custom_call.1} parent=1 // pred_check_branch
      %33 = sbr.rel (0) target = $region13
    $region12: #{tpu_custom_call.1} parent=1 // pred_region
      %s35 = ssub.s32 64, 64
      %36 = vsyncadd [#allocation8], %s35
      %s38 = sshll.u32 [#allocation7], 4
      %s39 = int_to_ptr.vmem [resolvable:$true] %s38
      %41 = dma.hbm_to_vmem [thread:$0]  %s2, 64, %s39, [#allocation8]
    $region13: #{tpu_custom_call.1} parent=1 // pred_fallthru
      _
    // Predicated region
    $region14: #{tpu_custom_call.1} parent=1 // pred_check
      _
    $region15: #{tpu_custom_call.1} parent=1 // pred_check_branch
      %43 = sbr.rel (0) target = $region17
    $region16: #{tpu_custom_call.1} parent=1 // pred_region
      _
    $region17: #{tpu_custom_call.1} parent=1 // pred_fallthru
      _
    // Predicated region
    $region18: #{tpu_custom_call.1} parent=1 // pred_check
      _
    $region19: #{tpu_custom_call.1} parent=1 // pred_check_branch
      %45 = sbr.rel (0) target = $region21
    $region20: #{tpu_custom_call.1} parent=1 // pred_region
      %s47 = ssub.s32 64, 64
      %48 = vsyncadd [#allocation8], %s47
      %s50 = sshll.u32 [#allocation9], 4
      %s51 = int_to_ptr.vmem [resolvable:$true] %s50
      %53 = dma.hbm_to_vmem [thread:$0]  %s4, 64, %s51, [#allocation8]
    $region21: #{tpu_custom_call.1} parent=1 // pred_fallthru
      _
    // Predicated region
    $region22: #{tpu_custom_call.1} parent=1 // pred_check
      _
    $region23: #{tpu_custom_call.1} parent=1 // pred_check_branch
      %55 = sbr.rel (0) target = $region25
    $region24: #{tpu_custom_call.1} parent=1 // pred_region
      %56 = dma.done [#allocation5], 16
    $region25: #{tpu_custom_call.1} parent=1 // pred_fallthru
      _
    // Predicated region
    $region26: #{tpu_custom_call.1} parent=1 // pred_check
      _
    $region27: #{tpu_custom_call.1} parent=1 // pred_check_branch
      %58 = sbr.rel (0) target = $region29
    $region28: #{tpu_custom_call.1} parent=1 // pred_region
      %59 = dma.done [#allocation3], 64
    $region29: #{tpu_custom_call.1} parent=1 // pred_fallthru
      _
    // Predicated region
    $region30: #{tpu_custom_call.1} parent=1 // pred_check
      _
    $region31: #{tpu_custom_call.1} parent=1 // pred_check_branch
      %61 = sbr.rel (0) target = $region33
    $region32: #{tpu_custom_call.1} parent=1 // pred_region
      %62 = dma.done [#allocation8], 64
    $region33: #{tpu_custom_call.1} parent=1 // pred_fallthru
      _
    // Predicated region
    $region34: #{tpu_custom_call.1} parent=1 // pred_check
      _
    $region35: #{tpu_custom_call.1} parent=1 // pred_check_branch
      %64 = sbr.rel (0) target = $region37
    $region36: #{tpu_custom_call.1} parent=1 // pred_region
      %65 = dma.done [#allocation8], 64
    $region37: #{tpu_custom_call.1} parent=1 // pred_fallthru
      _
    %66 = sfence
    %v67 = vld [vmem:[#allocation6] sm:$0xf]
    %s68 = sld [smem:[#allocation2]]
    %v69 = vstv %s68
    %v70 = vmul.f32 %v67, %v69
    %v71 = vld [vmem:[#allocation7] sm:$0xf]
    %s72 = sld [smem:[#allocation2 + $0x1]]
    %v73 = vstv %s72
    %v74 = vmul.f32 %v71, %v73
    %v75 = vadd.f32 %v70, %v74
    %v76 = vld [vmem:[%s3] sm:$0xf]
    %s77 = sld [smem:[#allocation2 + $0x2]]
    %v78 = vstv %s77
    %v79 = vmul.f32 %v76, %v78
    %v80 = vadd.f32 %v75, %v79
    %v81 = vld [vmem:[#allocation9] sm:$0xf]
    %s82 = sld [smem:[#allocation2 + $0x3]]
    %v83 = vstv %s82
    %v84 = vmul.f32 %v81, %v83
    %v85 = vadd.f32 %v80, %v84
    %v86 = vlaneseq
    %vm87 = vcmp.ge.s32.totalorder %v86, 0
    %vm88 = vcmp.lt.s32.totalorder %v86, 512
    %vm89 = vmand %vm87, %vm88
    %90 = vst.msk [vmem:[#allocation10] sm:$0xf] %vm89, %v85
    // Predicated region
    $region38: #{tpu_custom_call.1} parent=1 // pred_check
      _
    $region39: #{tpu_custom_call.1} parent=1 // pred_check_branch
      %92 = sbr.rel (0) target = $region41
    $region40: #{tpu_custom_call.1} parent=1 // pred_region
      %s94 = ssub.s32 64, 64
      %95 = vsyncadd [#allocation4], %s94
      %s97 = sshll.u32 [#allocation10], 4
      %s98 = int_to_ptr.vmem [resolvable:$true] %s97
      %100 = dma.vmem_to_hbm [thread:$0]  %s98, 64, %s5, [#allocation4]
    $region41: #{tpu_custom_call.1} parent=1 // pred_fallthru
      _
    // Predicated region
    $region42: #{tpu_custom_call.1} parent=1 // pred_check
      _
    $region43: #{tpu_custom_call.1} parent=1 // pred_check_branch
      %102 = sbr.rel (0) target = $region45
    $region44: #{tpu_custom_call.1} parent=1 // pred_region
      %103 = dma.done [#allocation4], 64
    $region45: #{tpu_custom_call.1} parent=1 // pred_fallthru
      _
    %104 = vsyncpa [#allocation3], 1
    %105 = vsyncpa [#allocation8], 1
    %106 = vsyncpa [#allocation4], 1
    %107 = vsyncpa [#allocation5], 1

</llo_original>
